<compile_context>
chip_gen: v5e
topology: v5e:2x2
jax: 0.10.0
libtpu: 0.0.40
codegen_flags: <defaults>
</compile_context>

<pallas_src>
import jax
import jax.numpy as jnp
from jax.experimental import pallas as pl
from jax.experimental.pallas import tpu as pltpu

LANE = 128  # TPU lane width: hidden / action dims are padded to this.


def _round_up(n, m):
    return ((n + m - 1) // m) * m


# ---------------------------------------------------------------------------
# Pallas kernel: one batch tile, all (padded) weights VMEM-resident.
# ---------------------------------------------------------------------------
def qnet_kernel(x_ref, w1_ref, b1_ref, w2_ref, b2_ref, w3_ref, b3_ref, o_ref):
    # Raw f32 observations -> bf16 in-kernel (no wrapper pad/cast HBM pass).
    x = x_ref[...].astype(jnp.bfloat16)                              # (tb, obs)

    # Layer 1 (normalization pre-folded into w1/b1): bf16 MXU dot, f32 accum.
    h1 = jnp.dot(x, w1_ref[...], preferred_element_type=jnp.float32) + b1_ref[...]
    h1 = jnp.maximum(h1, 0.0).astype(jnp.bfloat16)

    # Layer 2
    h2 = jnp.dot(h1, w2_ref[...], preferred_element_type=jnp.float32) + b2_ref[...]
    h2 = jnp.maximum(h2, 0.0).astype(jnp.bfloat16)

    # Output layer (no activation).  bf16 store halves the dominant output
    # HBM stream; the real action columns are sliced + upcast outside.
    # NOTE: padded batch rows (boundary block) hold garbage; they are masked
    # out of the HBM writeback by Pallas and never summed over.
    # TODO(synk): if the consumer only needs max/argmax over actions (action
    # selection / TD target), reduce in-kernel and emit that instead.
    q = jnp.dot(h2, w3_ref[...], preferred_element_type=jnp.float32) + b3_ref[...]
    o_ref[...] = q.astype(o_ref.dtype)


# ---------------------------------------------------------------------------
# Wrapper: batch-tiled grid, no input pre-padding, slice real outputs back.
# ---------------------------------------------------------------------------
def qnetwork_forward(x, kernel_params, action_dim, *, tile_b=2048):
    """x: (batch, obs_dim) f32.  kernel_params from make_qnetwork_params.
    Returns (batch, action_dim) f32."""
    w1, b1, w2, b2, w3, b3 = kernel_params
    batch, obs_dim = x.shape
    assert w1.shape[0] == obs_dim, "W1 rows must match obs_dim (no x padding)"
    h1_p, h2_p, act_pad = w1.shape[1], w2.shape[1], w3.shape[1]

    # Big batch tile (per-grid-step overhead >> a small tile's work),
    # multiple of 8 sublanes, clamped to the batch; batch itself is NOT padded.
    tile_b = max(8, min(tile_b, _round_up(batch, 8)))
    n_steps = pl.cdiv(batch, tile_b)
    # Keep >= 2 grid steps so the "parallel" axis can shard across both
    # TensorCores on v7x (harmless single-TC elsewhere).
    if n_steps == 1 and batch >= 16:
        tile_b = _round_up(pl.cdiv(batch, 2), 8)
        n_steps = pl.cdiv(batch, tile_b)

    def const_spec(arr):
        # Weights/biases: same block every grid step -> stay VMEM-resident.
        return pl.BlockSpec(arr.shape, lambda i: (0, 0))

    flops = 2 * batch * (obs_dim * h1_p + h1_p * h2_p + h2_p * act_pad)
    bytes_accessed = (
        int(x.size) * x.dtype.itemsize
        + batch * act_pad * 2  # bf16 output
        + sum(int(p.size) * p.dtype.itemsize for p in kernel_params))

    out = pl.pallas_call(
        qnet_kernel,
        out_shape=jax.ShapeDtypeStruct((batch, act_pad), jnp.bfloat16),
        grid=(n_steps,),
        in_specs=[
            pl.BlockSpec((tile_b, obs_dim), lambda i: (i, 0)),   # stream x tiles
            const_spec(w1), const_spec(b1),
            const_spec(w2), const_spec(b2),
            const_spec(w3), const_spec(b3),
        ],
        out_specs=pl.BlockSpec((tile_b, act_pad), lambda i: (i, 0)),
        compiler_params=pltpu.CompilerParams(
            dimension_semantics=("parallel",)),                  # megacore on v7x
        cost_estimate=pl.CostEstimate(
            flops=flops, transcendentals=0, bytes_accessed=bytes_accessed),
    )(x, w1, b1, w2, b2, w3, b3)

    return out[:, :action_dim].astype(jnp.float32)


# ---------------------------------------------------------------------------
# Deterministic parameter construction (mirrors layer_init: orthogonal weight
# with gain std, constant-zero bias), plus normalization folding and padding.
# ---------------------------------------------------------------------------
def orthogonal_init(key, out_dim, in_dim, gain):
    n = max(out_dim, in_dim)
    a = jax.random.normal(key, (n, n), dtype=jnp.float32)
    q, r = jnp.linalg.qr(a)
    q = q * jnp.sign(jnp.diag(r))[None, :]
    w = q[:out_dim, :in_dim]              # PyTorch layout (out, in)
    return (gain * w).astype(jnp.float32)


def make_qnetwork_params(key, obs_dim, action_dim, low, high,
                         hidden_layers=(120, 84)):
    """Returns (kernel_params, ref_params).

    kernel_params: normalization folded into layer 1; W1 keeps K = obs_dim
                   (unpadded rows); hidden/action dims zero-padded to 128
                   lanes; weights bf16, biases f32 of shape (1, out_pad).
    ref_params:    exact f32 (in, out) weights + (out,) biases for the
                   pure-JAX reference (unfolded, unpadded).
    """
    dims = [obs_dim] + list(hidden_layers) + [action_dim]
    gains = [float(jnp.sqrt(2.0))] * len(hidden_layers) + [1.0]

    ref_params = []
    for i, (din, dout) in enumerate(zip(dims[:-1], dims[1:])):
        key, sub = jax.random.split(key)
        w_torch = orthogonal_init(sub, dout, din, gains[i])   # (out, in)
        w = jnp.transpose(w_torch)                            # (in, out) for x @ W
        b = jnp.zeros((dout,), dtype=jnp.float32)
        ref_params.append((w, b))

    (w1, b1), (w2, b2), (w3, b3) = ref_params

    # Fold min-max normalization into layer 1 (done in f32, then cast):
    #   (x - low) * inv @ W1 + b1 == x @ (inv[:,None]*W1) + (b1 - (low*inv)@W1)
    rng = high - low
    inv = jnp.where(rng != 0.0, 1.0 / rng, 0.0)   # degenerate dims contribute 0
    w1f = inv[:, None] * w1
    b1f = b1 - (low * inv) @ w1

    h1_p = _round_up(hidden_layers[0], LANE)
    h2_p = _round_up(hidden_layers[1], LANE)
    act_p = _round_up(action_dim, LANE)

    def pad_w(w, rows, cols):
        return jnp.pad(w, ((0, rows - w.shape[0]), (0, cols - w.shape[1])))

    def pad_b(b, cols):
        return jnp.pad(b, (0, cols - b.shape[0]))[None, :].astype(jnp.float32)

    kernel_params = (
        pad_w(w1f, obs_dim, h1_p).astype(jnp.bfloat16), pad_b(b1f, h1_p),
        pad_w(w2, h1_p, h2_p).astype(jnp.bfloat16),     pad_b(b2, h2_p),
        pad_w(w3, h2_p, act_p).astype(jnp.bfloat16),    pad_b(b3, act_p),
    )
    return kernel_params, ref_params


# Pure-JAX reference (exact f32, original formulation) for a sanity check.
def qnetwork_reference(x, low, high, ref_params):
    h = (x - low) / (high - low)
    for i, (w, b) in enumerate(ref_params):
        h = h @ w + b
        if i < len(ref_params) - 1:
            h = jnp.maximum(h, 0.0)
    return h


if __name__ == "__main__":
    # Synthetic observation / action space: obs shape (16,), 4 discrete actions.
    # batch=100 is deliberately NOT a multiple of the tile so the masked
    # partial boundary block path is exercised.
    batch = 100
    obs_dim = 16
    action_dim = 4

    key = jax.random.PRNGKey(0)
    key, kx = jax.random.split(key)

    # observation_space.low / high buffers (1-D, same shape as an observation).
    low = jnp.full((obs_dim,), -1.0, dtype=jnp.float32)
    high = jnp.full((obs_dim,), 1.0, dtype=jnp.float32)

    # Example observations in [-1, 1].
    x = jax.random.uniform(kx, (batch, obs_dim), dtype=jnp.float32,
                           minval=-1.0, maxval=1.0)

    kernel_params, ref_params = make_qnetwork_params(
        key, obs_dim, action_dim, low, high, hidden_layers=(120, 84))

    q = qnetwork_forward(x, kernel_params, action_dim)   # default tile_b=2048
    q = jax.block_until_ready(q)

    q_ref = qnetwork_reference(x, low, high, ref_params)
    assert q.shape == (batch, action_dim)
    # bf16 MXU inputs + bf16 output store with f32 accumulation: small,
    # bounded rounding error.
    assert jnp.allclose(q, q_ref, atol=5e-2, rtol=5e-2), "mismatch vs JAX reference"

    print("KERNEL_OK")
</pallas_src>

<mosaic_0001>
module attributes {stable_mosaic.version = 11 : i64} {
  func.func @qnet_kernel(%arg0: i32, %arg1: memref<56x16xf32, #tpu.memory_space<vmem>>, %arg2: memref<16x128xbf16, #tpu.memory_space<vmem>>, %arg3: memref<1x128xf32, #tpu.memory_space<vmem>>, %arg4: memref<128x128xbf16, #tpu.memory_space<vmem>>, %arg5: memref<1x128xf32, #tpu.memory_space<vmem>>, %arg6: memref<128x128xbf16, #tpu.memory_space<vmem>>, %arg7: memref<1x128xf32, #tpu.memory_space<vmem>>, %arg8: memref<56x128xbf16, #tpu.memory_space<vmem>>) attributes {dimension_semantics = [#tpu.dimension_semantics<parallel>], iteration_bounds = array<i64: 2>, scalar_prefetch = 0 : i64, scratch_operands = 0 : i64, tpu.core_type = #tpu.core_type<tc>, window_params = [{transform_indices = @transform_0, window_bounds = array<i64: 56, 16>}, {pipeline_mode = #tpu.pipeline_mode<synchronous>, transform_indices = @transform_1, window_bounds = array<i64: 16, 128>}, {pipeline_mode = #tpu.pipeline_mode<synchronous>, transform_indices = @transform_2, window_bounds = array<i64: 1, 128>}, {pipeline_mode = #tpu.pipeline_mode<synchronous>, transform_indices = @transform_3, window_bounds = array<i64: 128, 128>}, {pipeline_mode = #tpu.pipeline_mode<synchronous>, transform_indices = @transform_4, window_bounds = array<i64: 1, 128>}, {pipeline_mode = #tpu.pipeline_mode<synchronous>, transform_indices = @transform_5, window_bounds = array<i64: 128, 128>}, {pipeline_mode = #tpu.pipeline_mode<synchronous>, transform_indices = @transform_6, window_bounds = array<i64: 1, 128>}, {transform_indices = @transform_7, window_bounds = array<i64: 56, 128>}]} {
    %c0 = arith.constant 0 : index
    %c0_0 = arith.constant 0 : index
    %0 = vector.load %arg1[%c0, %c0_0] : memref<56x16xf32, #tpu.memory_space<vmem>>, vector<56x16xf32>
    %1 = arith.truncf %0 : vector<56x16xf32> to vector<56x16xbf16>
    %c0_1 = arith.constant 0 : index
    %c0_2 = arith.constant 0 : index
    %2 = vector.load %arg2[%c0_1, %c0_2] : memref<16x128xbf16, #tpu.memory_space<vmem>>, vector<16x128xbf16>
    %cst = arith.constant dense<0.000000e+00> : vector<56x128xf32>
    %3 = tpu.matmul %1, %2, %cst {dimension_numbers = #tpu.dot_dimension_numbers<[1], [0], [0], [1], [0, 0, 1, 1], [], []>} : vector<56x16xbf16>, vector<16x128xbf16>, vector<56x128xf32> -> vector<56x128xf32>
    %c0_3 = arith.constant 0 : index
    %c0_4 = arith.constant 0 : index
    %4 = vector.load %arg3[%c0_3, %c0_4] : memref<1x128xf32, #tpu.memory_space<vmem>>, vector<1x128xf32>
    %5 = vector.broadcast %4 : vector<1x128xf32> to vector<56x128xf32>
    %6 = arith.addf %3, %5 : vector<56x128xf32>
    %cst_5 = arith.constant 0.000000e+00 : f32
    %7 = vector.broadcast %cst_5 : f32 to vector<56x128xf32>
    %8 = arith.maximumf %6, %7 : vector<56x128xf32>
    %9 = arith.truncf %8 : vector<56x128xf32> to vector<56x128xbf16>
    %c0_6 = arith.constant 0 : index
    %c0_7 = arith.constant 0 : index
    %10 = vector.load %arg4[%c0_6, %c0_7] : memref<128x128xbf16, #tpu.memory_space<vmem>>, vector<128x128xbf16>
    %cst_8 = arith.constant dense<0.000000e+00> : vector<56x128xf32>
    %11 = tpu.matmul %9, %10, %cst_8 {dimension_numbers = #tpu.dot_dimension_numbers<[1], [0], [0], [1], [0, 0, 1, 1], [], []>} : vector<56x128xbf16>, vector<128x128xbf16>, vector<56x128xf32> -> vector<56x128xf32>
    %c0_9 = arith.constant 0 : index
    %c0_10 = arith.constant 0 : index
    %12 = vector.load %arg5[%c0_9, %c0_10] : memref<1x128xf32, #tpu.memory_space<vmem>>, vector<1x128xf32>
    %13 = vector.broadcast %12 : vector<1x128xf32> to vector<56x128xf32>
    %14 = arith.addf %11, %13 : vector<56x128xf32>
    %cst_11 = arith.constant 0.000000e+00 : f32
    %15 = vector.broadcast %cst_11 : f32 to vector<56x128xf32>
    %16 = arith.maximumf %14, %15 : vector<56x128xf32>
    %17 = arith.truncf %16 : vector<56x128xf32> to vector<56x128xbf16>
    %c0_12 = arith.constant 0 : index
    %c0_13 = arith.constant 0 : index
    %18 = vector.load %arg6[%c0_12, %c0_13] : memref<128x128xbf16, #tpu.memory_space<vmem>>, vector<128x128xbf16>
    %cst_14 = arith.constant dense<0.000000e+00> : vector<56x128xf32>
    %19 = tpu.matmul %17, %18, %cst_14 {dimension_numbers = #tpu.dot_dimension_numbers<[1], [0], [0], [1], [0, 0, 1, 1], [], []>} : vector<56x128xbf16>, vector<128x128xbf16>, vector<56x128xf32> -> vector<56x128xf32>
    %c0_15 = arith.constant 0 : index
    %c0_16 = arith.constant 0 : index
    %20 = vector.load %arg7[%c0_15, %c0_16] : memref<1x128xf32, #tpu.memory_space<vmem>>, vector<1x128xf32>
    %21 = vector.broadcast %20 : vector<1x128xf32> to vector<56x128xf32>
    %22 = arith.addf %19, %21 : vector<56x128xf32>
    %23 = arith.truncf %22 : vector<56x128xf32> to vector<56x128xbf16>
    %c0_17 = arith.constant 0 : index
    %c0_18 = arith.constant 0 : index
    %24 = vector.load %arg8[%c0_17, %c0_18] : memref<56x128xbf16, #tpu.memory_space<vmem>>, vector<56x128xbf16>
    tpu.vector_store %arg8[%c0_17, %c0_18], %23 {strides = array<i32>} : memref<56x128xbf16, #tpu.memory_space<vmem>>, vector<56x128xbf16>,
    return
  }
  func.func @transform_0(%arg0: i32) -> (i32, i32) {
    %c0_i32 = arith.constant 0 : i32
    %c0_i32_0 = arith.constant 0 : i32
    return %arg0, %c0_i32 : i32, i32
  }
  func.func @transform_1(%arg0: i32) -> (i32, i32) {
    %c0_i32 = arith.constant 0 : i32
    %c0_i32_0 = arith.constant 0 : i32
    %c0_i32_1 = arith.constant 0 : i32
    return %c0_i32, %c0_i32_0 : i32, i32
  }
  func.func @transform_2(%arg0: i32) -> (i32, i32) {
    %c0_i32 = arith.constant 0 : i32
    %c0_i32_0 = arith.constant 0 : i32
    %c0_i32_1 = arith.constant 0 : i32
    return %c0_i32, %c0_i32_0 : i32, i32
  }
  func.func @transform_3(%arg0: i32) -> (i32, i32) {
    %c0_i32 = arith.constant 0 : i32
    %c0_i32_0 = arith.constant 0 : i32
    %c0_i32_1 = arith.constant 0 : i32
    return %c0_i32, %c0_i32_0 : i32, i32
  }
  func.func @transform_4(%arg0: i32) -> (i32, i32) {
    %c0_i32 = arith.constant 0 : i32
    %c0_i32_0 = arith.constant 0 : i32
    %c0_i32_1 = arith.constant 0 : i32
    return %c0_i32, %c0_i32_0 : i32, i32
  }
  func.func @transform_5(%arg0: i32) -> (i32, i32) {
    %c0_i32 = arith.constant 0 : i32
    %c0_i32_0 = arith.constant 0 : i32
    %c0_i32_1 = arith.constant 0 : i32
    return %c0_i32, %c0_i32_0 : i32, i32
  }
  func.func @transform_6(%arg0: i32) -> (i32, i32) {
    %c0_i32 = arith.constant 0 : i32
    %c0_i32_0 = arith.constant 0 : i32
    %c0_i32_1 = arith.constant 0 : i32
    return %c0_i32, %c0_i32_0 : i32, i32
  }
  func.func @transform_7(%arg0: i32) -> (i32, i32) {
    %c0_i32 = arith.constant 0 : i32
    %c0_i32_0 = arith.constant 0 : i32
    return %arg0, %c0_i32 : i32, i32
  }
}

</mosaic_0001>

<llo_original>
// kernel: tpu_custom_call.1
$region0: #{tpu_custom_call.1}
  #allocation0 [shape = 'u32[]', space=smem, size = 0x4, offset = 0x4, fixed_abs, tag = 'smem constant byte address 0x4 - core index']
  #allocation1 [shape = 'u32[72,128]{1,0:T(1,128)}', space=vmem, size = 0x9000, scoped, tag = 'internal scratch']
  %s0 = inlined_call_operand.vmem [shape: f32[100,16], index: 0, kind: input, shape index: {}]
  %s1 = inlined_call_operand.vmem [shape: bf16[16,128], index: 1, kind: input, shape index: {}]
  %s2 = inlined_call_operand.vmem [shape: f32[1,128], index: 2, kind: input, shape index: {}]
  %s3 = inlined_call_operand.vmem [shape: bf16[128,128], index: 3, kind: input, shape index: {}]
  %s4 = inlined_call_operand.vmem [shape: f32[1,128], index: 4, kind: input, shape index: {}]
  %s5 = inlined_call_operand.hbm [shape: bf16[128,128], index: 5, kind: input, shape index: {}]
  %s6 = inlined_call_operand.vmem [shape: f32[1,128], index: 6, kind: input, shape index: {}]
  %s7 = inlined_call_operand.hbm [shape: bf16[100,128], index: 7, kind: output, shape index: {}]
  %s8 = sld [smem:[#allocation0]]
  $region65: #{tpu_custom_call.1} parent=0
    _
  %s10 = ssub.s32 1, %s8
  %s11 = scalar_select 0, %s10, %s8
  $region1: #{tpu_custom_call.1} parent=0
    #allocation2 [shape = 'u8[32768]{0}', space=vmem, size = 0x8000, scoped, tag = 'input window, operand 5, single buffered']
    #allocation3 [shape = 's32[2]{0}', space=sflag, size = 0x8, scoped, tag = 'scoped memory for tpu_custom_call.1']
    #allocation4 [shape = 's32[2]{0}', space=sflag, size = 0x8, scoped, tag = 'scoped memory for tpu_custom_call.1']
    #allocation5 [shape = 'u8[28672]{0}', space=vmem, size = 0x7000, scoped, tag = 'output window, operand 0']
    %12 = vsyncpa [#allocation3], 0
    %13 = vsyncpa [#allocation4], 0
    %s14 = scalar_lea.sflag [#allocation4], 1
    %15 = vsyncpa %s14, 0
    loop: start=0, step=1, limit=4
    $region2: #{tpu_custom_call.1} parent=1 // loop_pre_header
      _
    $region3: #{tpu_custom_call.1} parent=1 // loop_header
      %s17 = sphi 0, %s21
      %p18 = scmp.ge.s32.totalorder %s17, 4
      %s27 = sphi 0, %s29
      %s30 = sphi 0, %s27
      %s31 = sphi 0, %s30
      %s47 = sphi 0, %s31
      %s51 = sphi 0, %s51
      %s53 = sphi 0, %s51
      %s54 = sphi 0, %s53
      %s68 = sphi 0, %s54
      %s72 = sphi 0, %s72
      %s74 = sphi 0, %s72
      %s75 = sphi 0, %s74
      %s89 = sphi 0, %s75
      %s93 = sphi 0, %s93
      %s95 = sphi 0, %s93
      %s96 = sphi 0, %s95
      %s110 = sphi 0, %s96
      %s114 = sphi 0, %s114
      %s116 = sphi 0, %s114
      %s117 = sphi 0, %s116
      %s131 = sphi 0, %s117
      %s135 = sphi 0, %s135
      %s137 = sphi 0, %s135
      %s138 = sphi 0, %s137
      %s152 = sphi 0, %s138
      %s156 = sphi 0, %s156
      %s158 = sphi 0, %s156
      %s159 = sphi 0, %s158
      %s173 = sphi 0, %s159
      %s179 = sphi 0, %s181
      %s182 = sphi 0, %s179
      %s183 = sphi 0, %s182
      %s199 = sphi 0, %s183
    $region4: #{tpu_custom_call.1} parent=1 // loop_header_branch
      %20 = sbr.rel (%p18) target = $region8
    $region5: #{tpu_custom_call.1} parent=1 // loop_body
      %s22 = ssub.s32 %s17, 1
      %s23 = ssub.s32 %s17, 2
      %s24 = sadd.s32 %s17, 1
      %s25 = ssub.s32 %s17, %s24
      %p26 = scmp.eq.s32.totalorder %s25, 0
      %s28 = sadd.s32 %s27, 1
      %s29 = scalar_select %p26, %s27, %s28
      %p32 = pneg %p26
      %p33 = scmp.eq.s32.totalorder %s17, 1
      %p34 = por %p32, %p33
      %p35 = scmp.ne.s32.totalorder %s27, %s30
      %p36 = scmp.eq.s32.totalorder %s17, 0
      %p37 = por %p35, %p36
      %p38 = scmp.ne.s32.totalorder %s27, %s30
      %p39 = scmp.eq.s32.totalorder %s22, 1
      %p40 = por %p38, %p39
      %p41 = scmp.ne.s32.totalorder %s30, %s31
      %p42 = scmp.eq.s32.totalorder %s22, 0
      %p43 = por %p41, %p42
      %p44 = scmp.ne.s32.totalorder %s30, %s31
      %p45 = scmp.eq.s32.totalorder %s23, 1
      %p46 = por %p44, %p45
      %p48 = scmp.ne.s32.totalorder %s31, %s47
      %p49 = scmp.eq.s32.totalorder %s23, 0
      %p50 = por %p48, %p49
      %s52 = sadd.s32 %s51, 1
      %p55 = scmp.eq.s32.totalorder %s17, 1
      %p56 = scmp.ne.s32.totalorder %s51, %s53
      %p57 = scmp.eq.s32.totalorder %s17, 0
      %p58 = por %p56, %p57
      %p59 = scmp.ne.s32.totalorder %s51, %s53
      %p60 = scmp.eq.s32.totalorder %s22, 1
      %p61 = por %p59, %p60
      %p62 = scmp.ne.s32.totalorder %s53, %s54
      %p63 = scmp.eq.s32.totalorder %s22, 0
      %p64 = por %p62, %p63
      %p65 = scmp.ne.s32.totalorder %s53, %s54
      %p66 = scmp.eq.s32.totalorder %s23, 1
      %p67 = por %p65, %p66
      %p69 = scmp.ne.s32.totalorder %s54, %s68
      %p70 = scmp.eq.s32.totalorder %s23, 0
      %p71 = por %p69, %p70
      %s73 = sadd.s32 %s72, 1
      %p76 = scmp.eq.s32.totalorder %s17, 1
      %p77 = scmp.ne.s32.totalorder %s72, %s74
      %p78 = scmp.eq.s32.totalorder %s17, 0
      %p79 = por %p77, %p78
      %p80 = scmp.ne.s32.totalorder %s72, %s74
      %p81 = scmp.eq.s32.totalorder %s22, 1
      %p82 = por %p80, %p81
      %p83 = scmp.ne.s32.totalorder %s74, %s75
      %p84 = scmp.eq.s32.totalorder %s22, 0
      %p85 = por %p83, %p84
      %p86 = scmp.ne.s32.totalorder %s74, %s75
      %p87 = scmp.eq.s32.totalorder %s23, 1
      %p88 = por %p86, %p87
      %p90 = scmp.ne.s32.totalorder %s75, %s89
      %p91 = scmp.eq.s32.totalorder %s23, 0
      %p92 = por %p90, %p91
      %s94 = sadd.s32 %s93, 1
      %p97 = scmp.eq.s32.totalorder %s17, 1
      %p98 = scmp.ne.s32.totalorder %s93, %s95
      %p99 = scmp.eq.s32.totalorder %s17, 0
      %p100 = por %p98, %p99
      %p101 = scmp.ne.s32.totalorder %s93, %s95
      %p102 = scmp.eq.s32.totalorder %s22, 1
      %p103 = por %p101, %p102
      %p104 = scmp.ne.s32.totalorder %s95, %s96
      %p105 = scmp.eq.s32.totalorder %s22, 0
      %p106 = por %p104, %p105
      %p107 = scmp.ne.s32.totalorder %s95, %s96
      %p108 = scmp.eq.s32.totalorder %s23, 1
      %p109 = por %p107, %p108
      %p111 = scmp.ne.s32.totalorder %s96, %s110
      %p112 = scmp.eq.s32.totalorder %s23, 0
      %p113 = por %p111, %p112
      %s115 = sadd.s32 %s114, 1
      %p118 = scmp.eq.s32.totalorder %s17, 1
      %p119 = scmp.ne.s32.totalorder %s114, %s116
      %p120 = scmp.eq.s32.totalorder %s17, 0
      %p121 = por %p119, %p120
      %p122 = scmp.ne.s32.totalorder %s114, %s116
      %p123 = scmp.eq.s32.totalorder %s22, 1
      %p124 = por %p122, %p123
      %p125 = scmp.ne.s32.totalorder %s116, %s117
      %p126 = scmp.eq.s32.totalorder %s22, 0
      %p127 = por %p125, %p126
      %p128 = scmp.ne.s32.totalorder %s116, %s117
      %p129 = scmp.eq.s32.totalorder %s23, 1
      %p130 = por %p128, %p129
      %p132 = scmp.ne.s32.totalorder %s117, %s131
      %p133 = scmp.eq.s32.totalorder %s23, 0
      %p134 = por %p132, %p133
      %s136 = sadd.s32 %s135, 1
      %p139 = scmp.eq.s32.totalorder %s17, 1
      %p140 = scmp.ne.s32.totalorder %s135, %s137
      %p141 = scmp.eq.s32.totalorder %s17, 0
      %p142 = por %p140, %p141
      %p143 = scmp.ne.s32.totalorder %s135, %s137
      %p144 = scmp.eq.s32.totalorder %s22, 1
      %p145 = por %p143, %p144
      %p146 = scmp.ne.s32.totalorder %s137, %s138
      %p147 = scmp.eq.s32.totalorder %s22, 0
      %p148 = por %p146, %p147
      %p149 = scmp.ne.s32.totalorder %s137, %s138
      %p150 = scmp.eq.s32.totalorder %s23, 1
      %p151 = por %p149, %p150
      %p153 = scmp.ne.s32.totalorder %s138, %s152
      %p154 = scmp.eq.s32.totalorder %s23, 0
      %p155 = por %p153, %p154
      %s157 = sadd.s32 %s156, 1
      %p160 = scmp.eq.s32.totalorder %s17, 1
      %p161 = scmp.ne.s32.totalorder %s156, %s158
      %p162 = scmp.eq.s32.totalorder %s17, 0
      %p163 = por %p161, %p162
      %p164 = scmp.ne.s32.totalorder %s156, %s158
      %p165 = scmp.eq.s32.totalorder %s22, 1
      %p166 = por %p164, %p165
      %p167 = scmp.ne.s32.totalorder %s158, %s159
      %p168 = scmp.eq.s32.totalorder %s22, 0
      %p169 = por %p167, %p168
      %p170 = scmp.ne.s32.totalorder %s158, %s159
      %p171 = scmp.eq.s32.totalorder %s23, 1
      %p172 = por %p170, %p171
      %p174 = scmp.ne.s32.totalorder %s159, %s173
      %p175 = scmp.eq.s32.totalorder %s23, 0
      %p176 = por %p174, %p175
      %s177 = ssub.s32 %s17, %s24
      %p178 = scmp.eq.s32.totalorder %s177, 0
      %s180 = sadd.s32 %s179, 1
      %s181 = scalar_select %p178, %s179, %s180
      %p184 = pneg %p178
      %p185 = scmp.eq.s32.totalorder %s17, 1
      %p186 = por %p184, %p185
      %p187 = scmp.ne.s32.totalorder %s179, %s182
      %p188 = scmp.eq.s32.totalorder %s17, 0
      %p189 = por %p187, %p188
      %p190 = scmp.ne.s32.totalorder %s179, %s182
      %p191 = scmp.eq.s32.totalorder %s22, 1
      %p192 = por %p190, %p191
      %p193 = scmp.ne.s32.totalorder %s182, %s183
      %p194 = scmp.eq.s32.totalorder %s22, 0
      %p195 = por %p193, %p194
      %p196 = scmp.ne.s32.totalorder %s182, %s183
      %p197 = scmp.eq.s32.totalorder %s23, 1
      %p198 = por %p196, %p197
      %p200 = scmp.ne.s32.totalorder %s183, %s199
      %p201 = scmp.eq.s32.totalorder %s23, 0
      %p202 = por %p200, %p201
      %p203 = scmp.le.s32.totalorder 1, %s17
      %p204 = scmp.lt.s32.totalorder %s17, 3
      %p205 = pnand %p203, %p204
      %p206 = pneg %p205
      // Predicated region
      $region9: #{tpu_custom_call.1} parent=5 // pred_check
        _
      $region10: #{tpu_custom_call.1} parent=5 // pred_check_branch
        %208 = sbr.rel (%p205) target = $region12
      $region11: #{tpu_custom_call.1} parent=5 // pred_region
        %s209 = ssub.s32 %s17, 1
        // Predicated region
        $region13: #{tpu_custom_call.1} parent=11 // pred_check
          %p210 = pneg %p64
        $region14: #{tpu_custom_call.1} parent=11 // pred_check_branch
          %212 = sbr.rel (%p210) target = $region16
        $region15: #{tpu_custom_call.1} parent=11 // pred_region
          _
        $region16: #{tpu_custom_call.1} parent=11 // pred_fallthru
          _
        // Predicated region
        $region17: #{tpu_custom_call.1} parent=11 // pred_check
          %p213 = pneg %p85
        $region18: #{tpu_custom_call.1} parent=11 // pred_check_branch
          %215 = sbr.rel (%p213) target = $region20
        $region19: #{tpu_custom_call.1} parent=11 // pred_region
          _
        $region20: #{tpu_custom_call.1} parent=11 // pred_fallthru
          _
        // Predicated region
        $region21: #{tpu_custom_call.1} parent=11 // pred_check
          %p216 = pneg %p106
        $region22: #{tpu_custom_call.1} parent=11 // pred_check_branch
          %218 = sbr.rel (%p216) target = $region24
        $region23: #{tpu_custom_call.1} parent=11 // pred_region
          _
        $region24: #{tpu_custom_call.1} parent=11 // pred_fallthru
          _
        // Predicated region
        $region25: #{tpu_custom_call.1} parent=11 // pred_check
          %p219 = pneg %p127
        $region26: #{tpu_custom_call.1} parent=11 // pred_check_branch
          %221 = sbr.rel (%p219) target = $region28
        $region27: #{tpu_custom_call.1} parent=11 // pred_region
          _
        $region28: #{tpu_custom_call.1} parent=11 // pred_fallthru
          _
        // Predicated region
        $region29: #{tpu_custom_call.1} parent=11 // pred_check
          %p222 = pneg %p148
        $region30: #{tpu_custom_call.1} parent=11 // pred_check_branch
          %224 = sbr.rel (%p222) target = $region32
        $region31: #{tpu_custom_call.1} parent=11 // pred_region
          %226 = vsyncadd [#allocation3], 0
          %s227 = sshll.u32 %s5, 4
          %s228 = int_to_ptr.hbm [resolvable:$true] %s227
          %s229 = sshll.u32 [#allocation2], 4
          %s230 = int_to_ptr.vmem [resolvable:$true] %s229
          %235 = dma.hbm_to_vmem [thread:$0]  %s228, 1024, %s230, [#allocation3], 64, 64, 4
        $region32: #{tpu_custom_call.1} parent=11 // pred_fallthru
          _
        // Predicated region
        $region33: #{tpu_custom_call.1} parent=11 // pred_check
          %p236 = pneg %p169
        $region34: #{tpu_custom_call.1} parent=11 // pred_check_branch
          %238 = sbr.rel (%p236) target = $region36
        $region35: #{tpu_custom_call.1} parent=11 // pred_region
          _
        $region36: #{tpu_custom_call.1} parent=11 // pred_fallthru
          _
      $region12: #{tpu_custom_call.1} parent=5 // pred_fallthru
        _
      %p239 = scmp.lt.s32.totalorder %s17, 2
      // Predicated region
      $region37: #{tpu_custom_call.1} parent=5 // pred_check
        %p240 = pneg %p239
      $region38: #{tpu_custom_call.1} parent=5 // pred_check_branch
        %242 = sbr.rel (%p240) target = $region40
      $region39: #{tpu_custom_call.1} parent=5 // pred_region
        // Predicated region
        $region41: #{tpu_custom_call.1} parent=39 // pred_check
          %p243 = pneg %p37
        $region42: #{tpu_custom_call.1} parent=39 // pred_check_branch
          %245 = sbr.rel (%p243) target = $region44
        $region43: #{tpu_custom_call.1} parent=39 // pred_region
          %s246 = smul.u32 7, %s17
          %s247 = ssub.s32 13, %s246
          %p248 = scmp.lt.s32.totalorder %s247, 7
          %s249 = scalar_select %p248, %s247, 7
          %s250 = smul.u32 8, %s249
          %p251 = scmp.lt.s32.totalorder %s246, 12
          %s252 = scalar_select %p251, %s246, 12
          %s253 = smul.addr %s252, 8
          %s254 = scalar_lea.vmem %s0, %s253
          %s255 = smul.u32 7, %s17
          %s256 = ssub.s32 13, %s255
          %p257 = scmp.lt.s32.totalorder %s256, 7
          %s258 = scalar_select %p257, %s256, 7
          %s259 = smul.u32 8, %s258
        $region44: #{tpu_custom_call.1} parent=39 // pred_fallthru
          _
      $region40: #{tpu_custom_call.1} parent=5 // pred_fallthru
        _
      %p260 = scmp.le.s32.totalorder 1, %s17
      %p261 = scmp.lt.s32.totalorder %s17, 3
      %p262 = pnand %p260, %p261
      %p263 = pneg %p262
      // Predicated region
      $region45: #{tpu_custom_call.1} parent=5 // pred_check
        _
      $region46: #{tpu_custom_call.1} parent=5 // pred_check_branch
        %265 = sbr.rel (%p262) target = $region48
      $region47: #{tpu_custom_call.1} parent=5 // pred_region
        %s266 = ssub.s32 %s17, 1
        // Predicated region
        $region49: #{tpu_custom_call.1} parent=47 // pred_check
          %p267 = pneg %p148
        $region50: #{tpu_custom_call.1} parent=47 // pred_check_branch
          %269 = sbr.rel (%p267) target = $region52
        $region51: #{tpu_custom_call.1} parent=47 // pred_region
          %271 = dma.done [#allocation3], 1024
        $region52: #{tpu_custom_call.1} parent=47 // pred_fallthru
          _
        %s272 = smul.u32 7, %s22
        %s273 = ssub.s32 13, %s272
        %p274 = scmp.lt.s32.totalorder %s273, 7
        %s275 = scalar_select %p274, %s273, 7
        %s276 = smul.u32 8, %s275
        %p277 = scmp.lt.s32.totalorder %s272, 12
        %s278 = scalar_select %p277, %s272, 12
        %s279 = smul.addr %s278, 8
        %s280 = scalar_lea.vmem %s0, %s279
        %p281 = pneg %p43
        %p282 = pneg %p40
        %p283 = pneg %p64
        %p284 = pneg %p61
        %p285 = pneg %p85
        %p286 = pneg %p82
        %p287 = pneg %p106
        %p288 = pneg %p103
        %p289 = pneg %p127
        %p290 = pneg %p124
        %p291 = pneg %p148
        %p292 = pneg %p145
        %p293 = pneg %p169
        %p294 = pneg %p166
        %p295 = pneg %p195
        %p296 = pneg %p192
        %s297 = sand.u32 %s182, 1
        %s298 = scalar_lea.sflag [#allocation4], %s297
        %s299 = sand.u32 %s182, 1
        %s300 = smul.addr %s299, 28
        %s301 = scalar_lea.vmem [#allocation5], %s300
        %s302 = smul.u32 7, %s22
        %s303 = ssub.s32 13, %s302
        %p304 = scmp.lt.s32.totalorder %s303, 7
        %s305 = scalar_select %p304, %s303, 7
        %s306 = smul.u32 8, %s305
        %p307 = scmp.lt.s32.totalorder %s302, 12
        %s308 = scalar_select %p307, %s302, 12
        %s309 = smul.addr %s308, 8
        %s310 = scalar_lea.vmem %s0, %s309
        %s311 = smul.u32 7, %s22
        %s312 = ssub.s32 13, %s311
        %p313 = scmp.lt.s32.totalorder %s312, 7
        %s314 = scalar_select %p313, %s312, 7
        %s315 = smul.u32 8, %s314
        %s316 = smul.u32 7, %s22
        %s317 = ssub.s32 13, %s316
        %p318 = scmp.lt.s32.totalorder %s317, 7
        %s319 = scalar_select %p318, %s317, 7
        %s320 = smul.u32 4, %s319
        %v322 = vld [vmem:[%s310] sm:$0xff]
        %v323 = vld [vmem:[%s310 + $0x8] sm:$0xff]
        %v324 = vld [vmem:[%s310 + $0x10] sm:$0xff]
        %v325 = vld [vmem:[%s310 + $0x18] sm:$0xff]
        %v326 = vld [vmem:[%s310 + $0x20] sm:$0xff]
        %v327 = vld [vmem:[%s310 + $0x28] sm:$0xff]
        %v328 = vld [vmem:[%s310 + $0x30] sm:$0xff]
        %v329 = vpack.c.bf16 %v323, %v322
        %v330 = vpack.c.bf16 %v325, %v324
        %v331 = vpack.c.bf16 %v327, %v326
        %v332 = vpack.c.bf16 %v328, %v328
        %v333 = vld [vmem:[%s1] sm:$0xf]
        %v334 = vld [vmem:[%s1 + $0x4] sm:$0xf]
        %v335 = vld [vmem:[%s2] sm:$0x1]
        %v337 = vperm.slane %v335, 0
        %v341 = vunpack.c.l.b16 %v333
        %v342 = vunpack.c.l.b16 %v334
        %v343 = vpack.c.b16 %v342, %v341
        %vm345 = vcmask 130048
        %v347 = vsel %vm345, %v329, 0
        %v350 = vsel %vm345, %v330, 0
        %v353 = vsel %vm345, %v331, 0
        %v356 = vsel %vm345, %v332, 0
        %358 = vmatpush.bf16.msra.mxu0 0
        %359 = vmatpush.bf16.msra.mxu0 0
        %360 = vmatpush.bf16.msra.mxu0 0
        %361 = vmatpush.bf16.msra.mxu0 0
        %362 = vmatpush.bf16.msra.mxu0 0
        %363 = vmatpush.bf16.msra.mxu0 0
        %364 = vmatpush.bf16.msra.mxu0 0
        %365 = vmatpush.bf16.msra.mxu0 %v343
        %366 = vmatmul.bf16.gmra.mxu0 %v347
        %v367 = vpop.f32.mrf.mxu0
        %v368 = vadd.f32 %v337, %v367
        %v369 = vpop.f32.mrf.mxu0
        %v370 = vadd.f32 %v337, %v369
        %371 = vmatmul.bf16.gmra.mxu0 %v350
        %v372 = vpop.f32.mrf.mxu0
        %v373 = vadd.f32 %v337, %v372
        %v374 = vpop.f32.mrf.mxu0
        %v375 = vadd.f32 %v337, %v374
        %376 = vmatmul.bf16.gmra.mxu0 %v353
        %v377 = vpop.f32.mrf.mxu0
        %v378 = vadd.f32 %v337, %v377
        %v379 = vpop.f32.mrf.mxu0
        %v380 = vadd.f32 %v337, %v379
        %381 = vmatmul.bf16.gmra.mxu0 %v356
        %v382 = vpop.f32.mrf.mxu0
        %v383 = vadd.f32 %v337, %v382
        %v384 = vpop.f32.mrf.mxu0
        %385 = vdwg.mxu0
        %v386 = vmax.f32 %v368, 0.0
        %v387 = vmax.f32 %v370, 0.0
        %v388 = vmax.f32 %v373, 0.0
        %v389 = vmax.f32 %v375, 0.0
        %v390 = vmax.f32 %v378, 0.0
        %v391 = vmax.f32 %v380, 0.0
        %v392 = vmax.f32 %v383, 0.0
        %v393 = vpack.c.bf16 %v387, %v386
        %v394 = vpack.c.bf16 %v389, %v388
        %v395 = vpack.c.bf16 %v391, %v390
        %v396 = vpack.c.bf16 %v392, %v392
        %v397 = vld [vmem:[%s3] sm:$0xf]
        %v398 = vld [vmem:[%s3 + $0x4] sm:$0xf]
        %v399 = vld [vmem:[%s3 + $0x8] sm:$0xf]
        %v400 = vld [vmem:[%s3 + $0xc] sm:$0xf]
        %v401 = vld [vmem:[%s3 + $0x10] sm:$0xf]
        %v402 = vld [vmem:[%s3 + $0x14] sm:$0xf]
        %v403 = vld [vmem:[%s3 + $0x18] sm:$0xf]
        %v404 = vld [vmem:[%s3 + $0x1c] sm:$0xf]
        %v405 = vld [vmem:[%s3 + $0x20] sm:$0xf]
        %v406 = vld [vmem:[%s3 + $0x24] sm:$0xf]
        %v407 = vld [vmem:[%s3 + $0x28] sm:$0xf]
        %v408 = vld [vmem:[%s3 + $0x2c] sm:$0xf]
        %v409 = vld [vmem:[%s3 + $0x30] sm:$0xf]
        %v410 = vld [vmem:[%s3 + $0x34] sm:$0xf]
        %v411 = vld [vmem:[%s3 + $0x38] sm:$0xf]
        %v412 = vld [vmem:[%s3 + $0x3c] sm:$0xf]
        %v413 = vld [vmem:[%s4] sm:$0x1]
        %v415 = vperm.slane %v413, 0
        %v433 = vunpack.c.l.b16 %v397
        %v434 = vunpack.c.l.b16 %v398
        %v435 = vunpack.c.l.b16 %v399
        %v436 = vunpack.c.l.b16 %v400
        %v437 = vunpack.c.l.b16 %v401
        %v438 = vunpack.c.l.b16 %v402
        %v439 = vunpack.c.l.b16 %v403
        %v440 = vunpack.c.l.b16 %v404
        %v441 = vunpack.c.l.b16 %v405
        %v442 = vunpack.c.l.b16 %v406
        %v443 = vunpack.c.l.b16 %v407
        %v444 = vunpack.c.l.b16 %v408
        %v445 = vunpack.c.l.b16 %v409
        %v446 = vunpack.c.l.b16 %v410
        %v447 = vunpack.c.l.b16 %v411
        %v448 = vunpack.c.l.b16 %v412
        %v449 = vpack.c.b16 %v434, %v433
        %v450 = vpack.c.b16 %v436, %v435
        %v451 = vpack.c.b16 %v438, %v437
        %v452 = vpack.c.b16 %v440, %v439
        %v453 = vpack.c.b16 %v442, %v441
        %v454 = vpack.c.b16 %v444, %v443
        %v455 = vpack.c.b16 %v446, %v445
        %v456 = vpack.c.b16 %v448, %v447
        %465 = vmatpush.bf16.msra.mxu0 %v456
        %466 = vmatpush.bf16.msra.mxu0 %v455
        %467 = vmatpush.bf16.msra.mxu0 %v454
        %468 = vmatpush.bf16.msra.mxu0 %v453
        %469 = vmatpush.bf16.msra.mxu0 %v452
        %470 = vmatpush.bf16.msra.mxu0 %v451
        %471 = vmatpush.bf16.msra.mxu0 %v450
        %472 = vmatpush.bf16.msra.mxu0 %v449
        %473 = vmatmul.bf16.gmra.mxu0 %v393
        %v474 = vpop.f32.mrf.mxu0
        %v475 = vadd.f32 %v415, %v474
        %v476 = vpop.f32.mrf.mxu0
        %v477 = vadd.f32 %v415, %v476
        %478 = vmatmul.bf16.gmra.mxu0 %v394
        %v479 = vpop.f32.mrf.mxu0
        %v480 = vadd.f32 %v415, %v479
        %v481 = vpop.f32.mrf.mxu0
        %v482 = vadd.f32 %v415, %v481
        %483 = vmatmul.bf16.gmra.mxu0 %v395
        %v484 = vpop.f32.mrf.mxu0
        %v485 = vadd.f32 %v415, %v484
        %v486 = vpop.f32.mrf.mxu0
        %v487 = vadd.f32 %v415, %v486
        %488 = vmatmul.bf16.gmra.mxu0 %v396
        %v489 = vpop.f32.mrf.mxu0
        %v490 = vadd.f32 %v415, %v489
        %v491 = vpop.f32.mrf.mxu0
        %492 = vdwg.mxu0
        %v493 = vmax.f32 %v475, 0.0
        %v494 = vmax.f32 %v477, 0.0
        %v495 = vmax.f32 %v480, 0.0
        %v496 = vmax.f32 %v482, 0.0
        %v497 = vmax.f32 %v485, 0.0
        %v498 = vmax.f32 %v487, 0.0
        %v499 = vmax.f32 %v490, 0.0
        %v500 = vpack.c.bf16 %v494, %v493
        %v501 = vpack.c.bf16 %v496, %v495
        %v502 = vpack.c.bf16 %v498, %v497
        %v503 = vpack.c.bf16 %v499, %v499
        %v504 = vld [vmem:[#allocation2] sm:$0xf]
        %v505 = vld [vmem:[#allocation2 + $0x4] sm:$0xf]
        %v506 = vld [vmem:[#allocation2 + $0x8] sm:$0xf]
        %v507 = vld [vmem:[#allocation2 + $0xc] sm:$0xf]
        %v508 = vld [vmem:[#allocation2 + $0x10] sm:$0xf]
        %v509 = vld [vmem:[#allocation2 + $0x14] sm:$0xf]
        %v510 = vld [vmem:[#allocation2 + $0x18] sm:$0xf]
        %v511 = vld [vmem:[#allocation2 + $0x1c] sm:$0xf]
        %v512 = vld [vmem:[#allocation2 + $0x20] sm:$0xf]
        %v513 = vld [vmem:[#allocation2 + $0x24] sm:$0xf]
        %v514 = vld [vmem:[#allocation2 + $0x28] sm:$0xf]
        %v515 = vld [vmem:[#allocation2 + $0x2c] sm:$0xf]
        %v516 = vld [vmem:[#allocation2 + $0x30] sm:$0xf]
        %v517 = vld [vmem:[#allocation2 + $0x34] sm:$0xf]
        %v518 = vld [vmem:[#allocation2 + $0x38] sm:$0xf]
        %v519 = vld [vmem:[#allocation2 + $0x3c] sm:$0xf]
        %v520 = vld [vmem:[%s6] sm:$0x1]
        %v522 = vperm.slane %v520, 0
        %v540 = vunpack.c.l.b16 %v504
        %v541 = vunpack.c.l.b16 %v505
        %v542 = vunpack.c.l.b16 %v506
        %v543 = vunpack.c.l.b16 %v507
        %v544 = vunpack.c.l.b16 %v508
        %v545 = vunpack.c.l.b16 %v509
        %v546 = vunpack.c.l.b16 %v510
        %v547 = vunpack.c.l.b16 %v511
        %v548 = vunpack.c.l.b16 %v512
        %v549 = vunpack.c.l.b16 %v513
        %v550 = vunpack.c.l.b16 %v514
        %v551 = vunpack.c.l.b16 %v515
        %v552 = vunpack.c.l.b16 %v516
        %v553 = vunpack.c.l.b16 %v517
        %v554 = vunpack.c.l.b16 %v518
        %v555 = vunpack.c.l.b16 %v519
        %v556 = vpack.c.b16 %v541, %v540
        %v557 = vpack.c.b16 %v543, %v542
        %v558 = vpack.c.b16 %v545, %v544
        %v559 = vpack.c.b16 %v547, %v546
        %v560 = vpack.c.b16 %v549, %v548
        %v561 = vpack.c.b16 %v551, %v550
        %v562 = vpack.c.b16 %v553, %v552
        %v563 = vpack.c.b16 %v555, %v554
        %572 = vmatpush.bf16.msra.mxu0 %v563
        %573 = vmatpush.bf16.msra.mxu0 %v562
        %574 = vmatpush.bf16.msra.mxu0 %v561
        %575 = vmatpush.bf16.msra.mxu0 %v560
        %576 = vmatpush.bf16.msra.mxu0 %v559
        %577 = vmatpush.bf16.msra.mxu0 %v558
        %578 = vmatpush.bf16.msra.mxu0 %v557
        %579 = vmatpush.bf16.msra.mxu0 %v556
        %580 = vmatmul.bf16.gmra.mxu0 %v500
        %v581 = vpop.f32.mrf.mxu0
        %v582 = vadd.f32 %v522, %v581
        %v583 = vpop.f32.mrf.mxu0
        %v584 = vadd.f32 %v522, %v583
        %585 = vmatmul.bf16.gmra.mxu0 %v501
        %v586 = vpop.f32.mrf.mxu0
        %v587 = vadd.f32 %v522, %v586
        %v588 = vpop.f32.mrf.mxu0
        %v589 = vadd.f32 %v522, %v588
        %590 = vmatmul.bf16.gmra.mxu0 %v502
        %v591 = vpop.f32.mrf.mxu0
        %v592 = vadd.f32 %v522, %v591
        %v593 = vpop.f32.mrf.mxu0
        %v594 = vadd.f32 %v522, %v593
        %595 = vmatmul.bf16.gmra.mxu0 %v503
        %v596 = vpop.f32.mrf.mxu0
        %v597 = vadd.f32 %v522, %v596
        %v598 = vpop.f32.mrf.mxu0
        %599 = vdwg.mxu0
        %v600 = vpack.c.bf16 %v582, %v582
        %v601 = vpack.c.bf16 %v584, %v584
        %v602 = vpack.c.bf16 %v587, %v587
        %v603 = vpack.c.bf16 %v589, %v589
        %v604 = vpack.c.bf16 %v592, %v592
        %v605 = vpack.c.bf16 %v594, %v594
        %v606 = vpack.c.bf16 %v597, %v597
        %607 = vst [vmem:[%s301] sm:$0xf] %v600
        %608 = vst [vmem:[%s301 + $0x4] sm:$0xf] %v601
        %609 = vst [vmem:[%s301 + $0x8] sm:$0xf] %v602
        %610 = vst [vmem:[%s301 + $0xc] sm:$0xf] %v603
        %611 = vst [vmem:[%s301 + $0x10] sm:$0xf] %v604
        %612 = vst [vmem:[%s301 + $0x14] sm:$0xf] %v605
        %613 = vst [vmem:[%s301 + $0x18] sm:$0xf] %v606
        %s614 = sand.u32 %s182, 1
        %s615 = scalar_lea.sflag [#allocation4], %s614
        %s616 = sand.u32 %s182, 1
        %s617 = smul.addr %s616, 28
        %s618 = scalar_lea.vmem [#allocation5], %s617
        // Predicated region
        $region53: #{tpu_custom_call.1} parent=47 // pred_check
          %p619 = pneg %p192
        $region54: #{tpu_custom_call.1} parent=47 // pred_check_branch
          %621 = sbr.rel (%p619) target = $region56
        $region55: #{tpu_custom_call.1} parent=47 // pred_region
          %s622 = smul.u32 7, %s22
          %s623 = ssub.s32 13, %s622
          %p624 = scmp.lt.s32.totalorder %s623, 7
          %s625 = scalar_select %p624, %s623, 7
          %s626 = smul.u32 4, %s625
          %s627 = ssub.s32 28, %s626
          %s628 = sshll.u32 %s627, 4
          %629 = vsyncadd %s615, %s628
          %p630 = scmp.ne.s32.totalorder 0, %s626
          %s631 = smul.addr %s622, 4
          %s632 = scalar_lea.hbm %s7, %s631
          %s633 = smul.u32 4, %s625
          %s634 = sshll.u32 %s618, 4
          %s635 = int_to_ptr.vmem [resolvable:$true] %s634
          %s636 = sshll.u32 %s632, 4
          %s637 = int_to_ptr.hbm [resolvable:$true] %s636
          %s638 = sshll.u32 %s633, 4
          %642 = dma.vmem_to_hbm [thread:$0]  (%p630), %s635, %s638, %s637, %s615, 64, 64, 4
        $region56: #{tpu_custom_call.1} parent=47 // pred_fallthru
          _
      $region48: #{tpu_custom_call.1} parent=5 // pred_fallthru
        _
      %p643 = scmp.le.s32.totalorder 2, %s17
      // Predicated region
      $region57: #{tpu_custom_call.1} parent=5 // pred_check
        %p644 = pneg %p643
      $region58: #{tpu_custom_call.1} parent=5 // pred_check_branch
        %646 = sbr.rel (%p644) target = $region60
      $region59: #{tpu_custom_call.1} parent=5 // pred_region
        %s647 = ssub.s32 %s17, 2
        // Predicated region
        $region61: #{tpu_custom_call.1} parent=59 // pred_check
          %p648 = pneg %p198
        $region62: #{tpu_custom_call.1} parent=59 // pred_check_branch
          %650 = sbr.rel (%p648) target = $region64
        $region63: #{tpu_custom_call.1} parent=59 // pred_region
          %s651 = sand.u32 %s183, 1
          %s652 = scalar_lea.sflag [#allocation4], %s651
          %s653 = sand.u32 %s183, 1
          %s654 = smul.addr %s653, 28
          %s655 = scalar_lea.vmem [#allocation5], %s654
          %657 = dma.done %s652, 448
        $region64: #{tpu_custom_call.1} parent=59 // pred_fallthru
          _
      $region60: #{tpu_custom_call.1} parent=5 // pred_fallthru
        _
    $region6: #{tpu_custom_call.1} parent=1 // loop_footer
      %s21 = sadd.s32 1, %s17
    $region7: #{tpu_custom_call.1} parent=1 // loop_footer_branch
      %16 = sbr.rel target = $region3
    $region8: #{tpu_custom_call.1} parent=1 // loop_exit
      _
    %658 = vsyncpa [#allocation3], 1
    %s659 = scalar_lea.sflag [#allocation3], 1
    %660 = vsyncpa %s659, 1
    %661 = vsyncpa [#allocation4], 1
    %s662 = scalar_lea.sflag [#allocation4], 1
    %663 = vsyncpa %s662, 1

</llo_original>
